<compile_context>
chip_gen: v5e
topology: v5e:2x2
jax: 0.10.0
libtpu: 0.0.40
codegen_flags: <defaults>
</compile_context>

<pallas_src>
import functools

import jax
import jax.numpy as jnp
from jax.experimental import pallas as pl
from jax.experimental.pallas import tpu as pltpu

_LANE = 128
_SUBLANE = 8


def _round_up(x, m):
    return (x + m - 1) // m * m


def _mlp_kernel(num_linear, scalar_out, x_ref, *refs):
    """refs = (w0, b0, w1, b1, ..., w_{L-1}, b_{L-1}, out_ref)."""
    out_ref = refs[-1]
    wb = refs[:-1]

    h = x_ref[...]                                        # (bt, in) float32

    # Hidden layers: MXU matmul + bias + ReLU.
    for i in range(num_linear - 1):
        w = wb[2 * i][...]                                # (in_i, out_i)
        b = wb[2 * i + 1][...]                            # (1,  out_i)
        h = jnp.dot(h, w, preferred_element_type=jnp.float32) + b
        h = jnp.maximum(h, 0.0)

    w_last = wb[2 * (num_linear - 1)][...]
    b_last = wb[2 * (num_linear - 1) + 1][...]
    if scalar_out:
        # Final (hidden -> 1) layer on VPU/XLU: per-lane multiply + cross-lane
        # reduce. w_last is a (1, hidden) row, b_last is (1, 1).
        y = jnp.sum(h * w_last, axis=-1, keepdims=True) + b_last   # (bt, 1)
        # Broadcast over the 128 lanes so the store is an unmasked, lane-dense
        # vst; the wrapper slices column 0.
        out_ref[...] = jnp.broadcast_to(y, out_ref.shape).astype(out_ref.dtype)
    else:
        # Last weight/bias already zero-padded to a lane-dense (mult of 128) N.
        y = jnp.dot(h, w_last, preferred_element_type=jnp.float32) + b_last
        out_ref[...] = y.astype(out_ref.dtype)


def mlp_forward(x, weights, biases, *, batch_tile=256):
    """x: (B, input_size). weights[i]: (in_i, out_i) [already transposed from
    torch's (out, in)], biases[i]: (out_i,). Returns (B, out_size) float32."""
    x = jnp.asarray(x, jnp.float32)
    B, in_size = x.shape
    num_linear = len(weights)
    out_size = int(weights[-1].shape[1])
    scalar_out = out_size == 1

    # Batch tiling: sublane-aligned tile, capped by the (padded) batch.
    bt = min(int(batch_tile), _round_up(B, _SUBLANE))
    bt = _round_up(bt, _SUBLANE)
    B_pad = _round_up(B, bt)
    if B_pad != B:
        x = jnp.pad(x, ((0, B_pad - B), (0, 0)))
    grid = (B_pad // bt,)

    # --- Operands + specs --------------------------------------------------
    operands = [x]
    in_specs = [pl.BlockSpec((bt, in_size), lambda i: (i, 0))]

    def _resident_spec(shape):
        # Grid-invariant operand (same block every step) -> stays in VMEM.
        # TODO(synk): pipeline_mode=pl.Buffered(1) would drop the redundant
        # second buffer for these grid-invariant operands; left at the default
        # double-buffering for portability.
        return pl.BlockSpec(shape, lambda i: (0, 0))

    for li in range(num_linear):
        w = jnp.asarray(weights[li], jnp.float32)
        b = jnp.asarray(biases[li], jnp.float32).reshape(1, -1)
        if li == num_linear - 1:
            if scalar_out:
                w = w.reshape(1, -1)      # (1, hidden) row for VPU reduction
                b = b.reshape(1, 1)
            else:
                out_pad_cols = _round_up(out_size, _LANE)
                if out_pad_cols != out_size:
                    w = jnp.pad(w, ((0, 0), (0, out_pad_cols - out_size)))
                    b = jnp.pad(b, ((0, 0), (0, out_pad_cols - out_size)))
        operands += [w, b]
        in_specs += [_resident_spec(w.shape), _resident_spec(b.shape)]

    out_pad = _LANE if scalar_out else _round_up(out_size, _LANE)
    out_spec = pl.BlockSpec((bt, out_pad), lambda i: (i, 0))

    # --- Explicit VMEM budget (portable to v7x's 64 MiB) --------------------
    def _tile_bytes(shape):
        r = shape[-2] if len(shape) > 1 else 1
        c = shape[-1]
        return _round_up(r, _SUBLANE) * _round_up(c, _LANE) * 4

    resident = sum(_tile_bytes(op.shape) for op in operands[1:])
    streamed = _tile_bytes((bt, in_size)) + _tile_bytes((bt, out_pad))
    budget = 2 * (resident + streamed) + (4 << 20)   # default double-buffering
    if budget > (60 << 20):
        raise ValueError(
            "weights + activation tiles exceed the portable 64 MiB VMEM "
            "budget (v7x); reduce batch_tile or tile the hidden dimension")
    vmem_limit = int(min(max(budget, 32 << 20), 64 << 20))

    kernel = functools.partial(_mlp_kernel, num_linear, scalar_out)
    out = pl.pallas_call(
        kernel,
        out_shape=jax.ShapeDtypeStruct((B_pad, out_pad), jnp.float32),
        grid_spec=pltpu.PrefetchScalarGridSpec(
            num_scalar_prefetch=0,
            grid=grid,
            in_specs=in_specs,
            out_specs=out_spec,
        ),
        compiler_params=pltpu.CompilerParams(
            dimension_semantics=("parallel",),
            vmem_limit_bytes=vmem_limit,
        ),
    )(*operands)
    return out[:B, :out_size]


def init_params(key, input_size, hidden_size, num_layers, output_size=1):
    """Deterministic init mirroring the torch module's layer shapes.
    Returns weights already transposed to (in, out)."""
    dims = [input_size] + [hidden_size] * (num_layers - 1) + [output_size]
    weights, biases = [], []
    for i in range(len(dims) - 1):
        key, kw, kb = jax.random.split(key, 3)
        fan_in, fan_out = dims[i], dims[i + 1]
        bound = 1.0 / (fan_in ** 0.5)
        w = jax.random.uniform(kw, (fan_in, fan_out), jnp.float32, -bound, bound)
        b = jax.random.uniform(kb, (fan_out,), jnp.float32, -bound, bound)
        weights.append(w)
        biases.append(b)
    return weights, biases


def reference_forward(x, weights, biases):
    h = x
    for i, (w, b) in enumerate(zip(weights, biases)):
        h = h @ w + b
        if i < len(weights) - 1:
            h = jnp.maximum(h, 0.0)
    return h


if __name__ == "__main__":
    input_size = 32
    hidden_size = 32
    num_layers = 4        # Linear+ReLU, 2x(Linear+ReLU), Linear -> 4 Linears
    output_size = 1
    batch = 512           # 2 grid steps of 256 rows -> both v7x TCs get work

    key = jax.random.PRNGKey(0)
    key, kx = jax.random.split(key)
    x = jax.random.normal(kx, (batch, input_size), dtype=jnp.float32)

    weights, biases = init_params(key, input_size, hidden_size, num_layers,
                                  output_size)

    out = mlp_forward(x, weights, biases)           # default batch_tile=256
    out = jax.block_until_ready(out)

    ref = reference_forward(x, weights, biases)
    assert out.shape == (batch, output_size), out.shape
    assert jnp.allclose(out, ref, atol=1e-4, rtol=1e-4), (
        float(jnp.max(jnp.abs(out - ref))))

    print("KERNEL_OK")
</pallas_src>

<mosaic_0001>
module attributes {stable_mosaic.version = 11 : i64} {
  func.func @_mlp_kernel(%arg0: i32, %arg1: memref<256x32xf32, #tpu.memory_space<vmem>>, %arg2: memref<32x32xf32, #tpu.memory_space<vmem>>, %arg3: memref<1x32xf32, #tpu.memory_space<vmem>>, %arg4: memref<32x32xf32, #tpu.memory_space<vmem>>, %arg5: memref<1x32xf32, #tpu.memory_space<vmem>>, %arg6: memref<32x32xf32, #tpu.memory_space<vmem>>, %arg7: memref<1x32xf32, #tpu.memory_space<vmem>>, %arg8: memref<1x32xf32, #tpu.memory_space<vmem>>, %arg9: memref<1x1xf32, #tpu.memory_space<vmem>>, %arg10: memref<256x128xf32, #tpu.memory_space<vmem>>) attributes {dimension_semantics = [#tpu.dimension_semantics<parallel>], iteration_bounds = array<i64: 2>, scalar_prefetch = 0 : i64, scratch_operands = 0 : i64, tpu.core_type = #tpu.core_type<tc>, window_params = [{transform_indices = @transform_0, window_bounds = array<i64: 256, 32>}, {pipeline_mode = #tpu.pipeline_mode<synchronous>, transform_indices = @transform_1, window_bounds = array<i64: 32, 32>}, {pipeline_mode = #tpu.pipeline_mode<synchronous>, transform_indices = @transform_2, window_bounds = array<i64: 1, 32>}, {pipeline_mode = #tpu.pipeline_mode<synchronous>, transform_indices = @transform_3, window_bounds = array<i64: 32, 32>}, {pipeline_mode = #tpu.pipeline_mode<synchronous>, transform_indices = @transform_4, window_bounds = array<i64: 1, 32>}, {pipeline_mode = #tpu.pipeline_mode<synchronous>, transform_indices = @transform_5, window_bounds = array<i64: 32, 32>}, {pipeline_mode = #tpu.pipeline_mode<synchronous>, transform_indices = @transform_6, window_bounds = array<i64: 1, 32>}, {pipeline_mode = #tpu.pipeline_mode<synchronous>, transform_indices = @transform_7, window_bounds = array<i64: 1, 32>}, {pipeline_mode = #tpu.pipeline_mode<synchronous>, transform_indices = @transform_8, window_bounds = array<i64: 1, 1>}, {transform_indices = @transform_9, window_bounds = array<i64: 256, 128>}]} {
    %c0 = arith.constant 0 : index
    %c0_0 = arith.constant 0 : index
    %0 = vector.load %arg1[%c0, %c0_0] : memref<256x32xf32, #tpu.memory_space<vmem>>, vector<256x32xf32>
    %c0_1 = arith.constant 0 : index
    %c0_2 = arith.constant 0 : index
    %1 = vector.load %arg2[%c0_1, %c0_2] : memref<32x32xf32, #tpu.memory_space<vmem>>, vector<32x32xf32>
    %c0_3 = arith.constant 0 : index
    %c0_4 = arith.constant 0 : index
    %2 = vector.load %arg3[%c0_3, %c0_4] : memref<1x32xf32, #tpu.memory_space<vmem>>, vector<1x32xf32>
    %cst = arith.constant dense<0.000000e+00> : vector<256x32xf32>
    %3 = tpu.matmul %0, %1, %cst {dimension_numbers = #tpu.dot_dimension_numbers<[1], [0], [0], [1], [0, 0, 1, 1], [], []>} : vector<256x32xf32>, vector<32x32xf32>, vector<256x32xf32> -> vector<256x32xf32>
    %4 = vector.broadcast %2 : vector<1x32xf32> to vector<256x32xf32>
    %5 = arith.addf %3, %4 : vector<256x32xf32>
    %cst_5 = arith.constant 0.000000e+00 : f32
    %6 = vector.broadcast %cst_5 : f32 to vector<256x32xf32>
    %7 = arith.maximumf %5, %6 : vector<256x32xf32>
    %c0_6 = arith.constant 0 : index
    %c0_7 = arith.constant 0 : index
    %8 = vector.load %arg4[%c0_6, %c0_7] : memref<32x32xf32, #tpu.memory_space<vmem>>, vector<32x32xf32>
    %c0_8 = arith.constant 0 : index
    %c0_9 = arith.constant 0 : index
    %9 = vector.load %arg5[%c0_8, %c0_9] : memref<1x32xf32, #tpu.memory_space<vmem>>, vector<1x32xf32>
    %cst_10 = arith.constant dense<0.000000e+00> : vector<256x32xf32>
    %10 = tpu.matmul %7, %8, %cst_10 {dimension_numbers = #tpu.dot_dimension_numbers<[1], [0], [0], [1], [0, 0, 1, 1], [], []>} : vector<256x32xf32>, vector<32x32xf32>, vector<256x32xf32> -> vector<256x32xf32>
    %11 = vector.broadcast %9 : vector<1x32xf32> to vector<256x32xf32>
    %12 = arith.addf %10, %11 : vector<256x32xf32>
    %cst_11 = arith.constant 0.000000e+00 : f32
    %13 = vector.broadcast %cst_11 : f32 to vector<256x32xf32>
    %14 = arith.maximumf %12, %13 : vector<256x32xf32>
    %c0_12 = arith.constant 0 : index
    %c0_13 = arith.constant 0 : index
    %15 = vector.load %arg6[%c0_12, %c0_13] : memref<32x32xf32, #tpu.memory_space<vmem>>, vector<32x32xf32>
    %c0_14 = arith.constant 0 : index
    %c0_15 = arith.constant 0 : index
    %16 = vector.load %arg7[%c0_14, %c0_15] : memref<1x32xf32, #tpu.memory_space<vmem>>, vector<1x32xf32>
    %cst_16 = arith.constant dense<0.000000e+00> : vector<256x32xf32>
    %17 = tpu.matmul %14, %15, %cst_16 {dimension_numbers = #tpu.dot_dimension_numbers<[1], [0], [0], [1], [0, 0, 1, 1], [], []>} : vector<256x32xf32>, vector<32x32xf32>, vector<256x32xf32> -> vector<256x32xf32>
    %18 = vector.broadcast %16 : vector<1x32xf32> to vector<256x32xf32>
    %19 = arith.addf %17, %18 : vector<256x32xf32>
    %cst_17 = arith.constant 0.000000e+00 : f32
    %20 = vector.broadcast %cst_17 : f32 to vector<256x32xf32>
    %21 = arith.maximumf %19, %20 : vector<256x32xf32>
    %c0_18 = arith.constant 0 : index
    %c0_19 = arith.constant 0 : index
    %22 = vector.load %arg8[%c0_18, %c0_19] : memref<1x32xf32, #tpu.memory_space<vmem>>, vector<1x32xf32>
    %c0_20 = arith.constant 0 : index
    %c0_21 = arith.constant 0 : index
    %23 = vector.load %arg9[%c0_20, %c0_21] : memref<1x1xf32, #tpu.memory_space<vmem>>, vector<1x1xf32>
    %24 = vector.broadcast %22 : vector<1x32xf32> to vector<256x32xf32>
    %25 = arith.mulf %21, %24 : vector<256x32xf32>
    %cst_22 = arith.constant dense<0.000000e+00> : vector<256xf32>
    %26 = vector.multi_reduction <add>, %25, %cst_22 [1] : vector<256x32xf32> to vector<256xf32>
    %27 = vector.shape_cast %26 : vector<256xf32> to vector<256x1xf32>
    %28 = vector.broadcast %23 : vector<1x1xf32> to vector<256x1xf32>
    %29 = arith.addf %27, %28 : vector<256x1xf32>
    %30 = vector.shape_cast %29 : vector<256x1xf32> to vector<256x1xf32>
    %31 = vector.broadcast %30 : vector<256x1xf32> to vector<256x128xf32>
    %c0_23 = arith.constant 0 : index
    %c0_24 = arith.constant 0 : index
    %32 = vector.load %arg10[%c0_23, %c0_24] : memref<256x128xf32, #tpu.memory_space<vmem>>, vector<256x128xf32>
    tpu.vector_store %arg10[%c0_23, %c0_24], %31 {strides = array<i32>} : memref<256x128xf32, #tpu.memory_space<vmem>>, vector<256x128xf32>,
    return
  }
  func.func @transform_0(%arg0: i32) -> (i32, i32) {
    %c0_i32 = arith.constant 0 : i32
    %c0_i32_0 = arith.constant 0 : i32
    return %arg0, %c0_i32 : i32, i32
  }
  func.func @transform_1(%arg0: i32) -> (i32, i32) {
    %c0_i32 = arith.constant 0 : i32
    %c0_i32_0 = arith.constant 0 : i32
    %c0_i32_1 = arith.constant 0 : i32
    return %c0_i32, %c0_i32_0 : i32, i32
  }
  func.func @transform_2(%arg0: i32) -> (i32, i32) {
    %c0_i32 = arith.constant 0 : i32
    %c0_i32_0 = arith.constant 0 : i32
    %c0_i32_1 = arith.constant 0 : i32
    return %c0_i32, %c0_i32_0 : i32, i32
  }
  func.func @transform_3(%arg0: i32) -> (i32, i32) {
    %c0_i32 = arith.constant 0 : i32
    %c0_i32_0 = arith.constant 0 : i32
    %c0_i32_1 = arith.constant 0 : i32
    return %c0_i32, %c0_i32_0 : i32, i32
  }
  func.func @transform_4(%arg0: i32) -> (i32, i32) {
    %c0_i32 = arith.constant 0 : i32
    %c0_i32_0 = arith.constant 0 : i32
    %c0_i32_1 = arith.constant 0 : i32
    return %c0_i32, %c0_i32_0 : i32, i32
  }
  func.func @transform_5(%arg0: i32) -> (i32, i32) {
    %c0_i32 = arith.constant 0 : i32
    %c0_i32_0 = arith.constant 0 : i32
    %c0_i32_1 = arith.constant 0 : i32
    return %c0_i32, %c0_i32_0 : i32, i32
  }
  func.func @transform_6(%arg0: i32) -> (i32, i32) {
    %c0_i32 = arith.constant 0 : i32
    %c0_i32_0 = arith.constant 0 : i32
    %c0_i32_1 = arith.constant 0 : i32
    return %c0_i32, %c0_i32_0 : i32, i32
  }
  func.func @transform_7(%arg0: i32) -> (i32, i32) {
    %c0_i32 = arith.constant 0 : i32
    %c0_i32_0 = arith.constant 0 : i32
    %c0_i32_1 = arith.constant 0 : i32
    return %c0_i32, %c0_i32_0 : i32, i32
  }
  func.func @transform_8(%arg0: i32) -> (i32, i32) {
    %c0_i32 = arith.constant 0 : i32
    %c0_i32_0 = arith.constant 0 : i32
    %c0_i32_1 = arith.constant 0 : i32
    return %c0_i32, %c0_i32_0 : i32, i32
  }
  func.func @transform_9(%arg0: i32) -> (i32, i32) {
    %c0_i32 = arith.constant 0 : i32
    %c0_i32_0 = arith.constant 0 : i32
    return %arg0, %c0_i32 : i32, i32
  }
}

</mosaic_0001>

<llo_original>
// kernel: tpu_custom_call.1
$region0: #{tpu_custom_call.1}
  #allocation0 [shape = 'u32[]', space=smem, size = 0x4, offset = 0x4, fixed_abs, tag = 'smem constant byte address 0x4 - core index']
  #allocation1 [shape = 'u32[72,128]{1,0:T(1,128)}', space=vmem, size = 0x9000, scoped, tag = 'internal scratch']
  #allocation2 [shape = 'f32[1,1]{1,0:T(1,128)S(1)}', space=vmem, size = 0x200, scoped, tag = 'scoped memory for tpu_custom_call.1']
  %s0 = inlined_call_operand.vmem [shape: f32[512,32], index: 0, kind: input, shape index: {}]
  %s1 = inlined_call_operand.vmem [shape: f32[32,32], index: 1, kind: input, shape index: {}]
  %s2 = inlined_call_operand.vmem [shape: f32[1,32], index: 2, kind: input, shape index: {}]
  %s3 = inlined_call_operand.vmem [shape: f32[32,32], index: 3, kind: input, shape index: {}]
  %s4 = inlined_call_operand.vmem [shape: f32[1,32], index: 4, kind: input, shape index: {}]
  %s5 = inlined_call_operand.vmem [shape: f32[32,32], index: 5, kind: input, shape index: {}]
  %s6 = inlined_call_operand.vmem [shape: f32[1,32], index: 6, kind: input, shape index: {}]
  %s7 = inlined_call_operand.vmem [shape: f32[1,32], index: 7, kind: input, shape index: {}]
  %s8 = inlined_call_operand.<no memory space> [shape: f32[1,1], index: 8, kind: input, shape index: {}]
  %s9 = inlined_call_operand.hbm [shape: f32[512,128], index: 9, kind: output, shape index: {}]
  %s10 = sld [smem:[#allocation0]]
  $region69: #{tpu_custom_call.1} parent=0
    _
  %s12 = ssub.s32 1, %s10
  %s13 = scalar_select 0, %s12, %s10
  %v14 = vstv %s8
  %15 = vst [vmem:[#allocation2] sm:$0x1] %v14
  $region1: #{tpu_custom_call.1} parent=0
    #allocation3 [shape = 'u8[262144]{0}', space=vmem, size = 0x40000, scoped, tag = 'output window, operand 0']
    #allocation4 [shape = 's32[2]{0}', space=sflag, size = 0x8, scoped, tag = 'scoped memory for tpu_custom_call.1']
    %16 = vsyncpa [#allocation4], 0
    %s17 = scalar_lea.sflag [#allocation4], 1
    %18 = vsyncpa %s17, 0
    loop: start=0, step=1, limit=4
    $region2: #{tpu_custom_call.1} parent=1 // loop_pre_header
      _
    $region3: #{tpu_custom_call.1} parent=1 // loop_header
      %s20 = sphi 0, %s24
      %p21 = scmp.ge.s32.totalorder %s20, 4
      %s30 = sphi 0, %s32
      %s33 = sphi 0, %s30
      %s34 = sphi 0, %s33
      %s50 = sphi 0, %s34
      %s54 = sphi 0, %s54
      %s56 = sphi 0, %s54
      %s57 = sphi 0, %s56
      %s71 = sphi 0, %s57
      %s75 = sphi 0, %s75
      %s77 = sphi 0, %s75
      %s78 = sphi 0, %s77
      %s92 = sphi 0, %s78
      %s96 = sphi 0, %s96
      %s98 = sphi 0, %s96
      %s99 = sphi 0, %s98
      %s113 = sphi 0, %s99
      %s117 = sphi 0, %s117
      %s119 = sphi 0, %s117
      %s120 = sphi 0, %s119
      %s134 = sphi 0, %s120
      %s138 = sphi 0, %s138
      %s140 = sphi 0, %s138
      %s141 = sphi 0, %s140
      %s155 = sphi 0, %s141
      %s159 = sphi 0, %s159
      %s161 = sphi 0, %s159
      %s162 = sphi 0, %s161
      %s176 = sphi 0, %s162
      %s180 = sphi 0, %s180
      %s182 = sphi 0, %s180
      %s183 = sphi 0, %s182
      %s197 = sphi 0, %s183
      %s201 = sphi 0, %s201
      %s203 = sphi 0, %s201
      %s204 = sphi 0, %s203
      %s218 = sphi 0, %s204
      %s224 = sphi 0, %s226
      %s227 = sphi 0, %s224
      %s228 = sphi 0, %s227
      %s244 = sphi 0, %s228
    $region4: #{tpu_custom_call.1} parent=1 // loop_header_branch
      %23 = sbr.rel (%p21) target = $region8
    $region5: #{tpu_custom_call.1} parent=1 // loop_body
      %s25 = ssub.s32 %s20, 1
      %s26 = ssub.s32 %s20, 2
      %s27 = sadd.s32 %s20, 1
      %s28 = ssub.s32 %s20, %s27
      %p29 = scmp.eq.s32.totalorder %s28, 0
      %s31 = sadd.s32 %s30, 1
      %s32 = scalar_select %p29, %s30, %s31
      %p35 = pneg %p29
      %p36 = scmp.eq.s32.totalorder %s20, 1
      %p37 = por %p35, %p36
      %p38 = scmp.ne.s32.totalorder %s30, %s33
      %p39 = scmp.eq.s32.totalorder %s20, 0
      %p40 = por %p38, %p39
      %p41 = scmp.ne.s32.totalorder %s30, %s33
      %p42 = scmp.eq.s32.totalorder %s25, 1
      %p43 = por %p41, %p42
      %p44 = scmp.ne.s32.totalorder %s33, %s34
      %p45 = scmp.eq.s32.totalorder %s25, 0
      %p46 = por %p44, %p45
      %p47 = scmp.ne.s32.totalorder %s33, %s34
      %p48 = scmp.eq.s32.totalorder %s26, 1
      %p49 = por %p47, %p48
      %p51 = scmp.ne.s32.totalorder %s34, %s50
      %p52 = scmp.eq.s32.totalorder %s26, 0
      %p53 = por %p51, %p52
      %s55 = sadd.s32 %s54, 1
      %p58 = scmp.eq.s32.totalorder %s20, 1
      %p59 = scmp.ne.s32.totalorder %s54, %s56
      %p60 = scmp.eq.s32.totalorder %s20, 0
      %p61 = por %p59, %p60
      %p62 = scmp.ne.s32.totalorder %s54, %s56
      %p63 = scmp.eq.s32.totalorder %s25, 1
      %p64 = por %p62, %p63
      %p65 = scmp.ne.s32.totalorder %s56, %s57
      %p66 = scmp.eq.s32.totalorder %s25, 0
      %p67 = por %p65, %p66
      %p68 = scmp.ne.s32.totalorder %s56, %s57
      %p69 = scmp.eq.s32.totalorder %s26, 1
      %p70 = por %p68, %p69
      %p72 = scmp.ne.s32.totalorder %s57, %s71
      %p73 = scmp.eq.s32.totalorder %s26, 0
      %p74 = por %p72, %p73
      %s76 = sadd.s32 %s75, 1
      %p79 = scmp.eq.s32.totalorder %s20, 1
      %p80 = scmp.ne.s32.totalorder %s75, %s77
      %p81 = scmp.eq.s32.totalorder %s20, 0
      %p82 = por %p80, %p81
      %p83 = scmp.ne.s32.totalorder %s75, %s77
      %p84 = scmp.eq.s32.totalorder %s25, 1
      %p85 = por %p83, %p84
      %p86 = scmp.ne.s32.totalorder %s77, %s78
      %p87 = scmp.eq.s32.totalorder %s25, 0
      %p88 = por %p86, %p87
      %p89 = scmp.ne.s32.totalorder %s77, %s78
      %p90 = scmp.eq.s32.totalorder %s26, 1
      %p91 = por %p89, %p90
      %p93 = scmp.ne.s32.totalorder %s78, %s92
      %p94 = scmp.eq.s32.totalorder %s26, 0
      %p95 = por %p93, %p94
      %s97 = sadd.s32 %s96, 1
      %p100 = scmp.eq.s32.totalorder %s20, 1
      %p101 = scmp.ne.s32.totalorder %s96, %s98
      %p102 = scmp.eq.s32.totalorder %s20, 0
      %p103 = por %p101, %p102
      %p104 = scmp.ne.s32.totalorder %s96, %s98
      %p105 = scmp.eq.s32.totalorder %s25, 1
      %p106 = por %p104, %p105
      %p107 = scmp.ne.s32.totalorder %s98, %s99
      %p108 = scmp.eq.s32.totalorder %s25, 0
      %p109 = por %p107, %p108
      %p110 = scmp.ne.s32.totalorder %s98, %s99
      %p111 = scmp.eq.s32.totalorder %s26, 1
      %p112 = por %p110, %p111
      %p114 = scmp.ne.s32.totalorder %s99, %s113
      %p115 = scmp.eq.s32.totalorder %s26, 0
      %p116 = por %p114, %p115
      %s118 = sadd.s32 %s117, 1
      %p121 = scmp.eq.s32.totalorder %s20, 1
      %p122 = scmp.ne.s32.totalorder %s117, %s119
      %p123 = scmp.eq.s32.totalorder %s20, 0
      %p124 = por %p122, %p123
      %p125 = scmp.ne.s32.totalorder %s117, %s119
      %p126 = scmp.eq.s32.totalorder %s25, 1
      %p127 = por %p125, %p126
      %p128 = scmp.ne.s32.totalorder %s119, %s120
      %p129 = scmp.eq.s32.totalorder %s25, 0
      %p130 = por %p128, %p129
      %p131 = scmp.ne.s32.totalorder %s119, %s120
      %p132 = scmp.eq.s32.totalorder %s26, 1
      %p133 = por %p131, %p132
      %p135 = scmp.ne.s32.totalorder %s120, %s134
      %p136 = scmp.eq.s32.totalorder %s26, 0
      %p137 = por %p135, %p136
      %s139 = sadd.s32 %s138, 1
      %p142 = scmp.eq.s32.totalorder %s20, 1
      %p143 = scmp.ne.s32.totalorder %s138, %s140
      %p144 = scmp.eq.s32.totalorder %s20, 0
      %p145 = por %p143, %p144
      %p146 = scmp.ne.s32.totalorder %s138, %s140
      %p147 = scmp.eq.s32.totalorder %s25, 1
      %p148 = por %p146, %p147
      %p149 = scmp.ne.s32.totalorder %s140, %s141
      %p150 = scmp.eq.s32.totalorder %s25, 0
      %p151 = por %p149, %p150
      %p152 = scmp.ne.s32.totalorder %s140, %s141
      %p153 = scmp.eq.s32.totalorder %s26, 1
      %p154 = por %p152, %p153
      %p156 = scmp.ne.s32.totalorder %s141, %s155
      %p157 = scmp.eq.s32.totalorder %s26, 0
      %p158 = por %p156, %p157
      %s160 = sadd.s32 %s159, 1
      %p163 = scmp.eq.s32.totalorder %s20, 1
      %p164 = scmp.ne.s32.totalorder %s159, %s161
      %p165 = scmp.eq.s32.totalorder %s20, 0
      %p166 = por %p164, %p165
      %p167 = scmp.ne.s32.totalorder %s159, %s161
      %p168 = scmp.eq.s32.totalorder %s25, 1
      %p169 = por %p167, %p168
      %p170 = scmp.ne.s32.totalorder %s161, %s162
      %p171 = scmp.eq.s32.totalorder %s25, 0
      %p172 = por %p170, %p171
      %p173 = scmp.ne.s32.totalorder %s161, %s162
      %p174 = scmp.eq.s32.totalorder %s26, 1
      %p175 = por %p173, %p174
      %p177 = scmp.ne.s32.totalorder %s162, %s176
      %p178 = scmp.eq.s32.totalorder %s26, 0
      %p179 = por %p177, %p178
      %s181 = sadd.s32 %s180, 1
      %p184 = scmp.eq.s32.totalorder %s20, 1
      %p185 = scmp.ne.s32.totalorder %s180, %s182
      %p186 = scmp.eq.s32.totalorder %s20, 0
      %p187 = por %p185, %p186
      %p188 = scmp.ne.s32.totalorder %s180, %s182
      %p189 = scmp.eq.s32.totalorder %s25, 1
      %p190 = por %p188, %p189
      %p191 = scmp.ne.s32.totalorder %s182, %s183
      %p192 = scmp.eq.s32.totalorder %s25, 0
      %p193 = por %p191, %p192
      %p194 = scmp.ne.s32.totalorder %s182, %s183
      %p195 = scmp.eq.s32.totalorder %s26, 1
      %p196 = por %p194, %p195
      %p198 = scmp.ne.s32.totalorder %s183, %s197
      %p199 = scmp.eq.s32.totalorder %s26, 0
      %p200 = por %p198, %p199
      %s202 = sadd.s32 %s201, 1
      %p205 = scmp.eq.s32.totalorder %s20, 1
      %p206 = scmp.ne.s32.totalorder %s201, %s203
      %p207 = scmp.eq.s32.totalorder %s20, 0
      %p208 = por %p206, %p207
      %p209 = scmp.ne.s32.totalorder %s201, %s203
      %p210 = scmp.eq.s32.totalorder %s25, 1
      %p211 = por %p209, %p210
      %p212 = scmp.ne.s32.totalorder %s203, %s204
      %p213 = scmp.eq.s32.totalorder %s25, 0
      %p214 = por %p212, %p213
      %p215 = scmp.ne.s32.totalorder %s203, %s204
      %p216 = scmp.eq.s32.totalorder %s26, 1
      %p217 = por %p215, %p216
      %p219 = scmp.ne.s32.totalorder %s204, %s218
      %p220 = scmp.eq.s32.totalorder %s26, 0
      %p221 = por %p219, %p220
      %s222 = ssub.s32 %s20, %s27
      %p223 = scmp.eq.s32.totalorder %s222, 0
      %s225 = sadd.s32 %s224, 1
      %s226 = scalar_select %p223, %s224, %s225
      %p229 = pneg %p223
      %p230 = scmp.eq.s32.totalorder %s20, 1
      %p231 = por %p229, %p230
      %p232 = scmp.ne.s32.totalorder %s224, %s227
      %p233 = scmp.eq.s32.totalorder %s20, 0
      %p234 = por %p232, %p233
      %p235 = scmp.ne.s32.totalorder %s224, %s227
      %p236 = scmp.eq.s32.totalorder %s25, 1
      %p237 = por %p235, %p236
      %p238 = scmp.ne.s32.totalorder %s227, %s228
      %p239 = scmp.eq.s32.totalorder %s25, 0
      %p240 = por %p238, %p239
      %p241 = scmp.ne.s32.totalorder %s227, %s228
      %p242 = scmp.eq.s32.totalorder %s26, 1
      %p243 = por %p241, %p242
      %p245 = scmp.ne.s32.totalorder %s228, %s244
      %p246 = scmp.eq.s32.totalorder %s26, 0
      %p247 = por %p245, %p246
      %p248 = scmp.le.s32.totalorder 1, %s20
      %p249 = scmp.lt.s32.totalorder %s20, 3
      %p250 = pnand %p248, %p249
      %p251 = pneg %p250
      // Predicated region
      $region9: #{tpu_custom_call.1} parent=5 // pred_check
        _
      $region10: #{tpu_custom_call.1} parent=5 // pred_check_branch
        %253 = sbr.rel (%p250) target = $region12
      $region11: #{tpu_custom_call.1} parent=5 // pred_region
        %s254 = ssub.s32 %s20, 1
        // Predicated region
        $region13: #{tpu_custom_call.1} parent=11 // pred_check
          %p255 = pneg %p67
        $region14: #{tpu_custom_call.1} parent=11 // pred_check_branch
          %257 = sbr.rel (%p255) target = $region16
        $region15: #{tpu_custom_call.1} parent=11 // pred_region
          _
        $region16: #{tpu_custom_call.1} parent=11 // pred_fallthru
          _
        // Predicated region
        $region17: #{tpu_custom_call.1} parent=11 // pred_check
          %p258 = pneg %p88
        $region18: #{tpu_custom_call.1} parent=11 // pred_check_branch
          %260 = sbr.rel (%p258) target = $region20
        $region19: #{tpu_custom_call.1} parent=11 // pred_region
          _
        $region20: #{tpu_custom_call.1} parent=11 // pred_fallthru
          _
        // Predicated region
        $region21: #{tpu_custom_call.1} parent=11 // pred_check
          %p261 = pneg %p109
        $region22: #{tpu_custom_call.1} parent=11 // pred_check_branch
          %263 = sbr.rel (%p261) target = $region24
        $region23: #{tpu_custom_call.1} parent=11 // pred_region
          _
        $region24: #{tpu_custom_call.1} parent=11 // pred_fallthru
          _
        // Predicated region
        $region25: #{tpu_custom_call.1} parent=11 // pred_check
          %p264 = pneg %p130
        $region26: #{tpu_custom_call.1} parent=11 // pred_check_branch
          %266 = sbr.rel (%p264) target = $region28
        $region27: #{tpu_custom_call.1} parent=11 // pred_region
          _
        $region28: #{tpu_custom_call.1} parent=11 // pred_fallthru
          _
        // Predicated region
        $region29: #{tpu_custom_call.1} parent=11 // pred_check
          %p267 = pneg %p151
        $region30: #{tpu_custom_call.1} parent=11 // pred_check_branch
          %269 = sbr.rel (%p267) target = $region32
        $region31: #{tpu_custom_call.1} parent=11 // pred_region
          _
        $region32: #{tpu_custom_call.1} parent=11 // pred_fallthru
          _
        // Predicated region
        $region33: #{tpu_custom_call.1} parent=11 // pred_check
          %p270 = pneg %p172
        $region34: #{tpu_custom_call.1} parent=11 // pred_check_branch
          %272 = sbr.rel (%p270) target = $region36
        $region35: #{tpu_custom_call.1} parent=11 // pred_region
          _
        $region36: #{tpu_custom_call.1} parent=11 // pred_fallthru
          _
        // Predicated region
        $region37: #{tpu_custom_call.1} parent=11 // pred_check
          %p273 = pneg %p193
        $region38: #{tpu_custom_call.1} parent=11 // pred_check_branch
          %275 = sbr.rel (%p273) target = $region40
        $region39: #{tpu_custom_call.1} parent=11 // pred_region
          _
        $region40: #{tpu_custom_call.1} parent=11 // pred_fallthru
          _
        // Predicated region
        $region41: #{tpu_custom_call.1} parent=11 // pred_check
          %p276 = pneg %p214
        $region42: #{tpu_custom_call.1} parent=11 // pred_check_branch
          %278 = sbr.rel (%p276) target = $region44
        $region43: #{tpu_custom_call.1} parent=11 // pred_region
          _
        $region44: #{tpu_custom_call.1} parent=11 // pred_fallthru
          _
      $region12: #{tpu_custom_call.1} parent=5 // pred_fallthru
        _
      %p279 = scmp.lt.s32.totalorder %s20, 2
      // Predicated region
      $region45: #{tpu_custom_call.1} parent=5 // pred_check
        %p280 = pneg %p279
      $region46: #{tpu_custom_call.1} parent=5 // pred_check_branch
        %282 = sbr.rel (%p280) target = $region48
      $region47: #{tpu_custom_call.1} parent=5 // pred_region
        // Predicated region
        $region49: #{tpu_custom_call.1} parent=47 // pred_check
          %p283 = pneg %p40
        $region50: #{tpu_custom_call.1} parent=47 // pred_check_branch
          %285 = sbr.rel (%p283) target = $region52
        $region51: #{tpu_custom_call.1} parent=47 // pred_region
          %s286 = smul.u32 32, %s20
          %p287 = scmp.lt.s32.totalorder %s286, 63
          %s288 = scalar_select %p287, %s286, 63
          %s289 = smul.addr %s288, 8
          %s290 = scalar_lea.vmem %s0, %s289
          %s291 = smul.u32 32, %s20
        $region52: #{tpu_custom_call.1} parent=47 // pred_fallthru
          _
      $region48: #{tpu_custom_call.1} parent=5 // pred_fallthru
        _
      %p292 = scmp.le.s32.totalorder 1, %s20
      %p293 = scmp.lt.s32.totalorder %s20, 3
      %p294 = pnand %p292, %p293
      %p295 = pneg %p294
      // Predicated region
      $region53: #{tpu_custom_call.1} parent=5 // pred_check
        _
      $region54: #{tpu_custom_call.1} parent=5 // pred_check_branch
        %297 = sbr.rel (%p294) target = $region56
      $region55: #{tpu_custom_call.1} parent=5 // pred_region
        %s298 = ssub.s32 %s20, 1
        %s299 = smul.u32 32, %s25
        %p300 = scmp.lt.s32.totalorder %s299, 63
        %s301 = scalar_select %p300, %s299, 63
        %s302 = smul.addr %s301, 8
        %s303 = scalar_lea.vmem %s0, %s302
        %p304 = pneg %p46
        %p305 = pneg %p43
        %p306 = pneg %p67
        %p307 = pneg %p64
        %p308 = pneg %p88
        %p309 = pneg %p85
        %p310 = pneg %p109
        %p311 = pneg %p106
        %p312 = pneg %p130
        %p313 = pneg %p127
        %p314 = pneg %p151
        %p315 = pneg %p148
        %p316 = pneg %p172
        %p317 = pneg %p169
        %p318 = pneg %p193
        %p319 = pneg %p190
        %p320 = pneg %p214
        %p321 = pneg %p211
        %p322 = pneg %p240
        %p323 = pneg %p237
        %s324 = sand.u32 %s227, 1
        %s325 = scalar_lea.sflag [#allocation4], %s324
        %s326 = sand.u32 %s227, 1
        %s327 = smul.addr %s326, 256
        %s328 = scalar_lea.vmem [#allocation3], %s327
        %s329 = smul.u32 32, %s25
        %p330 = scmp.lt.s32.totalorder %s329, 63
        %s331 = scalar_select %p330, %s329, 63
        %s332 = smul.addr %s331, 8
        %s333 = scalar_lea.vmem %s0, %s332
        %s334 = smul.u32 32, %s25
        %s335 = smul.u32 32, %s25
        %v336 = vld [vmem:[%s333] sm:$0xff]
        %v337 = vld [vmem:[%s333 + $0x8] sm:$0xff]
        %v338 = vld [vmem:[%s333 + $0x10] sm:$0xff]
        %v339 = vld [vmem:[%s333 + $0x18] sm:$0xff]
        %v340 = vld [vmem:[%s333 + $0x20] sm:$0xff]
        %v341 = vld [vmem:[%s333 + $0x28] sm:$0xff]
        %v342 = vld [vmem:[%s333 + $0x30] sm:$0xff]
        %v343 = vld [vmem:[%s333 + $0x38] sm:$0xff]
        %v344 = vld [vmem:[%s333 + $0x40] sm:$0xff]
        %v345 = vld [vmem:[%s333 + $0x48] sm:$0xff]
        %v346 = vld [vmem:[%s333 + $0x50] sm:$0xff]
        %v347 = vld [vmem:[%s333 + $0x58] sm:$0xff]
        %v348 = vld [vmem:[%s333 + $0x60] sm:$0xff]
        %v349 = vld [vmem:[%s333 + $0x68] sm:$0xff]
        %v350 = vld [vmem:[%s333 + $0x70] sm:$0xff]
        %v351 = vld [vmem:[%s333 + $0x78] sm:$0xff]
        %v352 = vld [vmem:[%s333 + $0x80] sm:$0xff]
        %v353 = vld [vmem:[%s333 + $0x88] sm:$0xff]
        %v354 = vld [vmem:[%s333 + $0x90] sm:$0xff]
        %v355 = vld [vmem:[%s333 + $0x98] sm:$0xff]
        %v356 = vld [vmem:[%s333 + $0xa0] sm:$0xff]
        %v357 = vld [vmem:[%s333 + $0xa8] sm:$0xff]
        %v358 = vld [vmem:[%s333 + $0xb0] sm:$0xff]
        %v359 = vld [vmem:[%s333 + $0xb8] sm:$0xff]
        %v360 = vld [vmem:[%s333 + $0xc0] sm:$0xff]
        %v361 = vld [vmem:[%s333 + $0xc8] sm:$0xff]
        %v362 = vld [vmem:[%s333 + $0xd0] sm:$0xff]
        %v363 = vld [vmem:[%s333 + $0xd8] sm:$0xff]
        %v364 = vld [vmem:[%s333 + $0xe0] sm:$0xff]
        %v365 = vld [vmem:[%s333 + $0xe8] sm:$0xff]
        %v366 = vld [vmem:[%s333 + $0xf0] sm:$0xff]
        %v367 = vld [vmem:[%s333 + $0xf8] sm:$0xff]
        %v368 = vld [vmem:[%s1] sm:$0xff]
        %v369 = vld [vmem:[%s1 + $0x8] sm:$0xff]
        %v370 = vld [vmem:[%s1 + $0x10] sm:$0xff]
        %v371 = vld [vmem:[%s1 + $0x18] sm:$0xff]
        %v372 = vld [vmem:[%s2] sm:$0x1]
        %v374 = vperm.slane %v372, 0
        %vm376 = vcmask 261120
        %v378 = vsel %vm376, %v336, 0
        %v381 = vsel %vm376, %v337, 0
        %v384 = vsel %vm376, %v338, 0
        %v387 = vsel %vm376, %v339, 0
        %v390 = vsel %vm376, %v340, 0
        %v393 = vsel %vm376, %v341, 0
        %v396 = vsel %vm376, %v342, 0
        %v399 = vsel %vm376, %v343, 0
        %v402 = vsel %vm376, %v344, 0
        %v405 = vsel %vm376, %v345, 0
        %v408 = vsel %vm376, %v346, 0
        %v411 = vsel %vm376, %v347, 0
        %v414 = vsel %vm376, %v348, 0
        %v417 = vsel %vm376, %v349, 0
        %v420 = vsel %vm376, %v350, 0
        %v423 = vsel %vm376, %v351, 0
        %v426 = vsel %vm376, %v352, 0
        %v429 = vsel %vm376, %v353, 0
        %v432 = vsel %vm376, %v354, 0
        %v435 = vsel %vm376, %v355, 0
        %v438 = vsel %vm376, %v356, 0
        %v441 = vsel %vm376, %v357, 0
        %v444 = vsel %vm376, %v358, 0
        %v447 = vsel %vm376, %v359, 0
        %v450 = vsel %vm376, %v360, 0
        %v453 = vsel %vm376, %v361, 0
        %v456 = vsel %vm376, %v362, 0
        %v459 = vsel %vm376, %v363, 0
        %v462 = vsel %vm376, %v364, 0
        %v465 = vsel %vm376, %v365, 0
        %v468 = vsel %vm376, %v366, 0
        %v471 = vsel %vm376, %v367, 0
        %473 = vmatpush.msra.mxu0 0.0
        %474 = vmatpush.msra.mxu0 0.0
        %475 = vmatpush.msra.mxu0 0.0
        %476 = vmatpush.msra.mxu0 0.0
        %477 = vmatpush.msra.mxu0 0.0
        %478 = vmatpush.msra.mxu0 0.0
        %479 = vmatpush.msra.mxu0 0.0
        %480 = vmatpush.msra.mxu0 0.0
        %481 = vmatpush.msra.mxu0 0.0
        %482 = vmatpush.msra.mxu0 0.0
        %483 = vmatpush.msra.mxu0 0.0
        %484 = vmatpush.msra.mxu0 0.0
        %485 = vmatpush.msra.mxu0 %v371
        %486 = vmatpush.msra.mxu0 %v370
        %487 = vmatpush.msra.mxu0 %v369
        %488 = vmatpush.msra.mxu0 %v368
        %489 = vmatmul.f32.gmra.mxu0 %v378
        %v490 = vpop.f32.mrf.mxu0
        %v491 = vadd.f32 %v374, %v490
        %492 = vmatmul.f32.gmra.mxu0 %v381
        %v493 = vpop.f32.mrf.mxu0
        %v494 = vadd.f32 %v374, %v493
        %495 = vmatmul.f32.gmra.mxu0 %v384
        %v496 = vpop.f32.mrf.mxu0
        %v497 = vadd.f32 %v374, %v496
        %498 = vmatmul.f32.gmra.mxu0 %v387
        %v499 = vpop.f32.mrf.mxu0
        %v500 = vadd.f32 %v374, %v499
        %501 = vmatmul.f32.gmra.mxu0 %v390
        %v502 = vpop.f32.mrf.mxu0
        %v503 = vadd.f32 %v374, %v502
        %504 = vmatmul.f32.gmra.mxu0 %v393
        %v505 = vpop.f32.mrf.mxu0
        %v506 = vadd.f32 %v374, %v505
        %507 = vmatmul.f32.gmra.mxu0 %v396
        %v508 = vpop.f32.mrf.mxu0
        %v509 = vadd.f32 %v374, %v508
        %510 = vmatmul.f32.gmra.mxu0 %v399
        %v511 = vpop.f32.mrf.mxu0
        %v512 = vadd.f32 %v374, %v511
        %513 = vmatmul.f32.gmra.mxu0 %v402
        %v514 = vpop.f32.mrf.mxu0
        %v515 = vadd.f32 %v374, %v514
        %516 = vmatmul.f32.gmra.mxu0 %v405
        %v517 = vpop.f32.mrf.mxu0
        %v518 = vadd.f32 %v374, %v517
        %519 = vmatmul.f32.gmra.mxu0 %v408
        %v520 = vpop.f32.mrf.mxu0
        %v521 = vadd.f32 %v374, %v520
        %522 = vmatmul.f32.gmra.mxu0 %v411
        %v523 = vpop.f32.mrf.mxu0
        %v524 = vadd.f32 %v374, %v523
        %525 = vmatmul.f32.gmra.mxu0 %v414
        %v526 = vpop.f32.mrf.mxu0
        %v527 = vadd.f32 %v374, %v526
        %528 = vmatmul.f32.gmra.mxu0 %v417
        %v529 = vpop.f32.mrf.mxu0
        %v530 = vadd.f32 %v374, %v529
        %531 = vmatmul.f32.gmra.mxu0 %v420
        %v532 = vpop.f32.mrf.mxu0
        %v533 = vadd.f32 %v374, %v532
        %534 = vmatmul.f32.gmra.mxu0 %v423
        %v535 = vpop.f32.mrf.mxu0
        %v536 = vadd.f32 %v374, %v535
        %537 = vmatmul.f32.gmra.mxu0 %v426
        %v538 = vpop.f32.mrf.mxu0
        %v539 = vadd.f32 %v374, %v538
        %540 = vmatmul.f32.gmra.mxu0 %v429
        %v541 = vpop.f32.mrf.mxu0
        %v542 = vadd.f32 %v374, %v541
        %543 = vmatmul.f32.gmra.mxu0 %v432
        %v544 = vpop.f32.mrf.mxu0
        %v545 = vadd.f32 %v374, %v544
        %546 = vmatmul.f32.gmra.mxu0 %v435
        %v547 = vpop.f32.mrf.mxu0
        %v548 = vadd.f32 %v374, %v547
        %549 = vmatmul.f32.gmra.mxu0 %v438
        %v550 = vpop.f32.mrf.mxu0
        %v551 = vadd.f32 %v374, %v550
        %552 = vmatmul.f32.gmra.mxu0 %v441
        %v553 = vpop.f32.mrf.mxu0
        %v554 = vadd.f32 %v374, %v553
        %555 = vmatmul.f32.gmra.mxu0 %v444
        %v556 = vpop.f32.mrf.mxu0
        %v557 = vadd.f32 %v374, %v556
        %558 = vmatmul.f32.gmra.mxu0 %v447
        %v559 = vpop.f32.mrf.mxu0
        %v560 = vadd.f32 %v374, %v559
        %561 = vmatmul.f32.gmra.mxu0 %v450
        %v562 = vpop.f32.mrf.mxu0
        %v563 = vadd.f32 %v374, %v562
        %564 = vmatmul.f32.gmra.mxu0 %v453
        %v565 = vpop.f32.mrf.mxu0
        %v566 = vadd.f32 %v374, %v565
        %567 = vmatmul.f32.gmra.mxu0 %v456
        %v568 = vpop.f32.mrf.mxu0
        %v569 = vadd.f32 %v374, %v568
        %570 = vmatmul.f32.gmra.mxu0 %v459
        %v571 = vpop.f32.mrf.mxu0
        %v572 = vadd.f32 %v374, %v571
        %573 = vmatmul.f32.gmra.mxu0 %v462
        %v574 = vpop.f32.mrf.mxu0
        %v575 = vadd.f32 %v374, %v574
        %576 = vmatmul.f32.gmra.mxu0 %v465
        %v577 = vpop.f32.mrf.mxu0
        %v578 = vadd.f32 %v374, %v577
        %579 = vmatmul.f32.gmra.mxu0 %v468
        %v580 = vpop.f32.mrf.mxu0
        %v581 = vadd.f32 %v374, %v580
        %582 = vmatmul.f32.gmra.mxu0 %v471
        %v583 = vpop.f32.mrf.mxu0
        %v584 = vadd.f32 %v374, %v583
        %585 = vdwg.mxu0
        %v586 = vmax.f32 %v491, 0.0
        %v587 = vmax.f32 %v494, 0.0
        %v588 = vmax.f32 %v497, 0.0
        %v589 = vmax.f32 %v500, 0.0
        %v590 = vmax.f32 %v503, 0.0
        %v591 = vmax.f32 %v506, 0.0
        %v592 = vmax.f32 %v509, 0.0
        %v593 = vmax.f32 %v512, 0.0
        %v594 = vmax.f32 %v515, 0.0
        %v595 = vmax.f32 %v518, 0.0
        %v596 = vmax.f32 %v521, 0.0
        %v597 = vmax.f32 %v524, 0.0
        %v598 = vmax.f32 %v527, 0.0
        %v599 = vmax.f32 %v530, 0.0
        %v600 = vmax.f32 %v533, 0.0
        %v601 = vmax.f32 %v536, 0.0
        %v602 = vmax.f32 %v539, 0.0
        %v603 = vmax.f32 %v542, 0.0
        %v604 = vmax.f32 %v545, 0.0
        %v605 = vmax.f32 %v548, 0.0
        %v606 = vmax.f32 %v551, 0.0
        %v607 = vmax.f32 %v554, 0.0
        %v608 = vmax.f32 %v557, 0.0
        %v609 = vmax.f32 %v560, 0.0
        %v610 = vmax.f32 %v563, 0.0
        %v611 = vmax.f32 %v566, 0.0
        %v612 = vmax.f32 %v569, 0.0
        %v613 = vmax.f32 %v572, 0.0
        %v614 = vmax.f32 %v575, 0.0
        %v615 = vmax.f32 %v578, 0.0
        %v616 = vmax.f32 %v581, 0.0
        %v617 = vmax.f32 %v584, 0.0
        %v618 = vld [vmem:[%s3] sm:$0xff]
        %v619 = vld [vmem:[%s3 + $0x8] sm:$0xff]
        %v620 = vld [vmem:[%s3 + $0x10] sm:$0xff]
        %v621 = vld [vmem:[%s3 + $0x18] sm:$0xff]
        %v622 = vld [vmem:[%s4] sm:$0x1]
        %v624 = vperm.slane %v622, 0
        %v627 = vsel %vm376, %v586, 0
        %v630 = vsel %vm376, %v587, 0
        %v633 = vsel %vm376, %v588, 0
        %v636 = vsel %vm376, %v589, 0
        %v639 = vsel %vm376, %v590, 0
        %v642 = vsel %vm376, %v591, 0
        %v645 = vsel %vm376, %v592, 0
        %v648 = vsel %vm376, %v593, 0
        %v651 = vsel %vm376, %v594, 0
        %v654 = vsel %vm376, %v595, 0
        %v657 = vsel %vm376, %v596, 0
        %v660 = vsel %vm376, %v597, 0
        %v663 = vsel %vm376, %v598, 0
        %v666 = vsel %vm376, %v599, 0
        %v669 = vsel %vm376, %v600, 0
        %v672 = vsel %vm376, %v601, 0
        %v675 = vsel %vm376, %v602, 0
        %v678 = vsel %vm376, %v603, 0
        %v681 = vsel %vm376, %v604, 0
        %v684 = vsel %vm376, %v605, 0
        %v687 = vsel %vm376, %v606, 0
        %v690 = vsel %vm376, %v607, 0
        %v693 = vsel %vm376, %v608, 0
        %v696 = vsel %vm376, %v609, 0
        %v699 = vsel %vm376, %v610, 0
        %v702 = vsel %vm376, %v611, 0
        %v705 = vsel %vm376, %v612, 0
        %v708 = vsel %vm376, %v613, 0
        %v711 = vsel %vm376, %v614, 0
        %v714 = vsel %vm376, %v615, 0
        %v717 = vsel %vm376, %v616, 0
        %v720 = vsel %vm376, %v617, 0
        %722 = vmatpush.msra.mxu0 0.0
        %723 = vmatpush.msra.mxu0 0.0
        %724 = vmatpush.msra.mxu0 0.0
        %725 = vmatpush.msra.mxu0 0.0
        %726 = vmatpush.msra.mxu0 0.0
        %727 = vmatpush.msra.mxu0 0.0
        %728 = vmatpush.msra.mxu0 0.0
        %729 = vmatpush.msra.mxu0 0.0
        %730 = vmatpush.msra.mxu0 0.0
        %731 = vmatpush.msra.mxu0 0.0
        %732 = vmatpush.msra.mxu0 0.0
        %733 = vmatpush.msra.mxu0 0.0
        %734 = vmatpush.msra.mxu0 %v621
        %735 = vmatpush.msra.mxu0 %v620
        %736 = vmatpush.msra.mxu0 %v619
        %737 = vmatpush.msra.mxu0 %v618
        %738 = vmatmul.f32.gmra.mxu0 %v627
        %v739 = vpop.f32.mrf.mxu0
        %v740 = vadd.f32 %v624, %v739
        %741 = vmatmul.f32.gmra.mxu0 %v630
        %v742 = vpop.f32.mrf.mxu0
        %v743 = vadd.f32 %v624, %v742
        %744 = vmatmul.f32.gmra.mxu0 %v633
        %v745 = vpop.f32.mrf.mxu0
        %v746 = vadd.f32 %v624, %v745
        %747 = vmatmul.f32.gmra.mxu0 %v636
        %v748 = vpop.f32.mrf.mxu0
        %v749 = vadd.f32 %v624, %v748
        %750 = vmatmul.f32.gmra.mxu0 %v639
        %v751 = vpop.f32.mrf.mxu0
        %v752 = vadd.f32 %v624, %v751
        %753 = vmatmul.f32.gmra.mxu0 %v642
        %v754 = vpop.f32.mrf.mxu0
        %v755 = vadd.f32 %v624, %v754
        %756 = vmatmul.f32.gmra.mxu0 %v645
        %v757 = vpop.f32.mrf.mxu0
        %v758 = vadd.f32 %v624, %v757
        %759 = vmatmul.f32.gmra.mxu0 %v648
        %v760 = vpop.f32.mrf.mxu0
        %v761 = vadd.f32 %v624, %v760
        %762 = vmatmul.f32.gmra.mxu0 %v651
        %v763 = vpop.f32.mrf.mxu0
        %v764 = vadd.f32 %v624, %v763
        %765 = vmatmul.f32.gmra.mxu0 %v654
        %v766 = vpop.f32.mrf.mxu0
        %v767 = vadd.f32 %v624, %v766
        %768 = vmatmul.f32.gmra.mxu0 %v657
        %v769 = vpop.f32.mrf.mxu0
        %v770 = vadd.f32 %v624, %v769
        %771 = vmatmul.f32.gmra.mxu0 %v660
        %v772 = vpop.f32.mrf.mxu0
        %v773 = vadd.f32 %v624, %v772
        %774 = vmatmul.f32.gmra.mxu0 %v663
        %v775 = vpop.f32.mrf.mxu0
        %v776 = vadd.f32 %v624, %v775
        %777 = vmatmul.f32.gmra.mxu0 %v666
        %v778 = vpop.f32.mrf.mxu0
        %v779 = vadd.f32 %v624, %v778
        %780 = vmatmul.f32.gmra.mxu0 %v669
        %v781 = vpop.f32.mrf.mxu0
        %v782 = vadd.f32 %v624, %v781
        %783 = vmatmul.f32.gmra.mxu0 %v672
        %v784 = vpop.f32.mrf.mxu0
        %v785 = vadd.f32 %v624, %v784
        %786 = vmatmul.f32.gmra.mxu0 %v675
        %v787 = vpop.f32.mrf.mxu0
        %v788 = vadd.f32 %v624, %v787
        %789 = vmatmul.f32.gmra.mxu0 %v678
        %v790 = vpop.f32.mrf.mxu0
        %v791 = vadd.f32 %v624, %v790
        %792 = vmatmul.f32.gmra.mxu0 %v681
        %v793 = vpop.f32.mrf.mxu0
        %v794 = vadd.f32 %v624, %v793
        %795 = vmatmul.f32.gmra.mxu0 %v684
        %v796 = vpop.f32.mrf.mxu0
        %v797 = vadd.f32 %v624, %v796
        %798 = vmatmul.f32.gmra.mxu0 %v687
        %v799 = vpop.f32.mrf.mxu0
        %v800 = vadd.f32 %v624, %v799
        %801 = vmatmul.f32.gmra.mxu0 %v690
        %v802 = vpop.f32.mrf.mxu0
        %v803 = vadd.f32 %v624, %v802
        %804 = vmatmul.f32.gmra.mxu0 %v693
        %v805 = vpop.f32.mrf.mxu0
        %v806 = vadd.f32 %v624, %v805
        %807 = vmatmul.f32.gmra.mxu0 %v696
        %v808 = vpop.f32.mrf.mxu0
        %v809 = vadd.f32 %v624, %v808
        %810 = vmatmul.f32.gmra.mxu0 %v699
        %v811 = vpop.f32.mrf.mxu0
        %v812 = vadd.f32 %v624, %v811
        %813 = vmatmul.f32.gmra.mxu0 %v702
        %v814 = vpop.f32.mrf.mxu0
        %v815 = vadd.f32 %v624, %v814
        %816 = vmatmul.f32.gmra.mxu0 %v705
        %v817 = vpop.f32.mrf.mxu0
        %v818 = vadd.f32 %v624, %v817
        %819 = vmatmul.f32.gmra.mxu0 %v708
        %v820 = vpop.f32.mrf.mxu0
        %v821 = vadd.f32 %v624, %v820
        %822 = vmatmul.f32.gmra.mxu0 %v711
        %v823 = vpop.f32.mrf.mxu0
        %v824 = vadd.f32 %v624, %v823
        %825 = vmatmul.f32.gmra.mxu0 %v714
        %v826 = vpop.f32.mrf.mxu0
        %v827 = vadd.f32 %v624, %v826
        %828 = vmatmul.f32.gmra.mxu0 %v717
        %v829 = vpop.f32.mrf.mxu0
        %v830 = vadd.f32 %v624, %v829
        %831 = vmatmul.f32.gmra.mxu0 %v720
        %v832 = vpop.f32.mrf.mxu0
        %v833 = vadd.f32 %v624, %v832
        %834 = vdwg.mxu0
        %v835 = vmax.f32 %v740, 0.0
        %v836 = vmax.f32 %v743, 0.0
        %v837 = vmax.f32 %v746, 0.0
        %v838 = vmax.f32 %v749, 0.0
        %v839 = vmax.f32 %v752, 0.0
        %v840 = vmax.f32 %v755, 0.0
        %v841 = vmax.f32 %v758, 0.0
        %v842 = vmax.f32 %v761, 0.0
        %v843 = vmax.f32 %v764, 0.0
        %v844 = vmax.f32 %v767, 0.0
        %v845 = vmax.f32 %v770, 0.0
        %v846 = vmax.f32 %v773, 0.0
        %v847 = vmax.f32 %v776, 0.0
        %v848 = vmax.f32 %v779, 0.0
        %v849 = vmax.f32 %v782, 0.0
        %v850 = vmax.f32 %v785, 0.0
        %v851 = vmax.f32 %v788, 0.0
        %v852 = vmax.f32 %v791, 0.0
        %v853 = vmax.f32 %v794, 0.0
        %v854 = vmax.f32 %v797, 0.0
        %v855 = vmax.f32 %v800, 0.0
        %v856 = vmax.f32 %v803, 0.0
        %v857 = vmax.f32 %v806, 0.0
        %v858 = vmax.f32 %v809, 0.0
        %v859 = vmax.f32 %v812, 0.0
        %v860 = vmax.f32 %v815, 0.0
        %v861 = vmax.f32 %v818, 0.0
        %v862 = vmax.f32 %v821, 0.0
        %v863 = vmax.f32 %v824, 0.0
        %v864 = vmax.f32 %v827, 0.0
        %v865 = vmax.f32 %v830, 0.0
        %v866 = vmax.f32 %v833, 0.0
        %v867 = vld [vmem:[%s5] sm:$0xff]
        %v868 = vld [vmem:[%s5 + $0x8] sm:$0xff]
        %v869 = vld [vmem:[%s5 + $0x10] sm:$0xff]
        %v870 = vld [vmem:[%s5 + $0x18] sm:$0xff]
        %v871 = vld [vmem:[%s6] sm:$0x1]
        %v873 = vperm.slane %v871, 0
        %v876 = vsel %vm376, %v835, 0
        %v879 = vsel %vm376, %v836, 0
        %v882 = vsel %vm376, %v837, 0
        %v885 = vsel %vm376, %v838, 0
        %v888 = vsel %vm376, %v839, 0
        %v891 = vsel %vm376, %v840, 0
        %v894 = vsel %vm376, %v841, 0
        %v897 = vsel %vm376, %v842, 0
        %v900 = vsel %vm376, %v843, 0
        %v903 = vsel %vm376, %v844, 0
        %v906 = vsel %vm376, %v845, 0
        %v909 = vsel %vm376, %v846, 0
        %v912 = vsel %vm376, %v847, 0
        %v915 = vsel %vm376, %v848, 0
        %v918 = vsel %vm376, %v849, 0
        %v921 = vsel %vm376, %v850, 0
        %v924 = vsel %vm376, %v851, 0
        %v927 = vsel %vm376, %v852, 0
        %v930 = vsel %vm376, %v853, 0
        %v933 = vsel %vm376, %v854, 0
        %v936 = vsel %vm376, %v855, 0
        %v939 = vsel %vm376, %v856, 0
        %v942 = vsel %vm376, %v857, 0
        %v945 = vsel %vm376, %v858, 0
        %v948 = vsel %vm376, %v859, 0
        %v951 = vsel %vm376, %v860, 0
        %v954 = vsel %vm376, %v861, 0
        %v957 = vsel %vm376, %v862, 0
        %v960 = vsel %vm376, %v863, 0
        %v963 = vsel %vm376, %v864, 0
        %v966 = vsel %vm376, %v865, 0
        %v969 = vsel %vm376, %v866, 0
        %971 = vmatpush.msra.mxu0 0.0
        %972 = vmatpush.msra.mxu0 0.0
        %973 = vmatpush.msra.mxu0 0.0
        %974 = vmatpush.msra.mxu0 0.0
        %975 = vmatpush.msra.mxu0 0.0
        %976 = vmatpush.msra.mxu0 0.0
        %977 = vmatpush.msra.mxu0 0.0
        %978 = vmatpush.msra.mxu0 0.0
        %979 = vmatpush.msra.mxu0 0.0
        %980 = vmatpush.msra.mxu0 0.0
        %981 = vmatpush.msra.mxu0 0.0
        %982 = vmatpush.msra.mxu0 0.0
        %983 = vmatpush.msra.mxu0 %v870
        %984 = vmatpush.msra.mxu0 %v869
        %985 = vmatpush.msra.mxu0 %v868
        %986 = vmatpush.msra.mxu0 %v867
        %987 = vmatmul.f32.gmra.mxu0 %v876
        %v988 = vpop.f32.mrf.mxu0
        %v989 = vadd.f32 %v873, %v988
        %990 = vmatmul.f32.gmra.mxu0 %v879
        %v991 = vpop.f32.mrf.mxu0
        %v992 = vadd.f32 %v873, %v991
        %993 = vmatmul.f32.gmra.mxu0 %v882
        %v994 = vpop.f32.mrf.mxu0
        %v995 = vadd.f32 %v873, %v994
        %996 = vmatmul.f32.gmra.mxu0 %v885
        %v997 = vpop.f32.mrf.mxu0
        %v998 = vadd.f32 %v873, %v997
        %999 = vmatmul.f32.gmra.mxu0 %v888
        %v1000 = vpop.f32.mrf.mxu0
        %v1001 = vadd.f32 %v873, %v1000
        %1002 = vmatmul.f32.gmra.mxu0 %v891
        %v1003 = vpop.f32.mrf.mxu0
        %v1004 = vadd.f32 %v873, %v1003
        %1005 = vmatmul.f32.gmra.mxu0 %v894
        %v1006 = vpop.f32.mrf.mxu0
        %v1007 = vadd.f32 %v873, %v1006
        %1008 = vmatmul.f32.gmra.mxu0 %v897
        %v1009 = vpop.f32.mrf.mxu0
        %v1010 = vadd.f32 %v873, %v1009
        %1011 = vmatmul.f32.gmra.mxu0 %v900
        %v1012 = vpop.f32.mrf.mxu0
        %v1013 = vadd.f32 %v873, %v1012
        %1014 = vmatmul.f32.gmra.mxu0 %v903
        %v1015 = vpop.f32.mrf.mxu0
        %v1016 = vadd.f32 %v873, %v1015
        %1017 = vmatmul.f32.gmra.mxu0 %v906
        %v1018 = vpop.f32.mrf.mxu0
        %v1019 = vadd.f32 %v873, %v1018
        %1020 = vmatmul.f32.gmra.mxu0 %v909
        %v1021 = vpop.f32.mrf.mxu0
        %v1022 = vadd.f32 %v873, %v1021
        %1023 = vmatmul.f32.gmra.mxu0 %v912
        %v1024 = vpop.f32.mrf.mxu0
        %v1025 = vadd.f32 %v873, %v1024
        %1026 = vmatmul.f32.gmra.mxu0 %v915
        %v1027 = vpop.f32.mrf.mxu0
        %v1028 = vadd.f32 %v873, %v1027
        %1029 = vmatmul.f32.gmra.mxu0 %v918
        %v1030 = vpop.f32.mrf.mxu0
        %v1031 = vadd.f32 %v873, %v1030
        %1032 = vmatmul.f32.gmra.mxu0 %v921
        %v1033 = vpop.f32.mrf.mxu0
        %v1034 = vadd.f32 %v873, %v1033
        %1035 = vmatmul.f32.gmra.mxu0 %v924
        %v1036 = vpop.f32.mrf.mxu0
        %v1037 = vadd.f32 %v873, %v1036
        %1038 = vmatmul.f32.gmra.mxu0 %v927
        %v1039 = vpop.f32.mrf.mxu0
        %v1040 = vadd.f32 %v873, %v1039
        %1041 = vmatmul.f32.gmra.mxu0 %v930
        %v1042 = vpop.f32.mrf.mxu0
        %v1043 = vadd.f32 %v873, %v1042
        %1044 = vmatmul.f32.gmra.mxu0 %v933
        %v1045 = vpop.f32.mrf.mxu0
        %v1046 = vadd.f32 %v873, %v1045
        %1047 = vmatmul.f32.gmra.mxu0 %v936
        %v1048 = vpop.f32.mrf.mxu0
        %v1049 = vadd.f32 %v873, %v1048
        %1050 = vmatmul.f32.gmra.mxu0 %v939
        %v1051 = vpop.f32.mrf.mxu0
        %v1052 = vadd.f32 %v873, %v1051
        %1053 = vmatmul.f32.gmra.mxu0 %v942
        %v1054 = vpop.f32.mrf.mxu0
        %v1055 = vadd.f32 %v873, %v1054
        %1056 = vmatmul.f32.gmra.mxu0 %v945
        %v1057 = vpop.f32.mrf.mxu0
        %v1058 = vadd.f32 %v873, %v1057
        %1059 = vmatmul.f32.gmra.mxu0 %v948
        %v1060 = vpop.f32.mrf.mxu0
        %v1061 = vadd.f32 %v873, %v1060
        %1062 = vmatmul.f32.gmra.mxu0 %v951
        %v1063 = vpop.f32.mrf.mxu0
        %v1064 = vadd.f32 %v873, %v1063
        %1065 = vmatmul.f32.gmra.mxu0 %v954
        %v1066 = vpop.f32.mrf.mxu0
        %v1067 = vadd.f32 %v873, %v1066
        %1068 = vmatmul.f32.gmra.mxu0 %v957
        %v1069 = vpop.f32.mrf.mxu0
        %v1070 = vadd.f32 %v873, %v1069
        %1071 = vmatmul.f32.gmra.mxu0 %v960
        %v1072 = vpop.f32.mrf.mxu0
        %v1073 = vadd.f32 %v873, %v1072
        %1074 = vmatmul.f32.gmra.mxu0 %v963
        %v1075 = vpop.f32.mrf.mxu0
        %v1076 = vadd.f32 %v873, %v1075
        %1077 = vmatmul.f32.gmra.mxu0 %v966
        %v1078 = vpop.f32.mrf.mxu0
        %v1079 = vadd.f32 %v873, %v1078
        %1080 = vmatmul.f32.gmra.mxu0 %v969
        %v1081 = vpop.f32.mrf.mxu0
        %v1082 = vadd.f32 %v873, %v1081
        %1083 = vdwg.mxu0
        %v1084 = vmax.f32 %v989, 0.0
        %v1085 = vmax.f32 %v992, 0.0
        %v1086 = vmax.f32 %v995, 0.0
        %v1087 = vmax.f32 %v998, 0.0
        %v1088 = vmax.f32 %v1001, 0.0
        %v1089 = vmax.f32 %v1004, 0.0
        %v1090 = vmax.f32 %v1007, 0.0
        %v1091 = vmax.f32 %v1010, 0.0
        %v1092 = vmax.f32 %v1013, 0.0
        %v1093 = vmax.f32 %v1016, 0.0
        %v1094 = vmax.f32 %v1019, 0.0
        %v1095 = vmax.f32 %v1022, 0.0
        %v1096 = vmax.f32 %v1025, 0.0
        %v1097 = vmax.f32 %v1028, 0.0
        %v1098 = vmax.f32 %v1031, 0.0
        %v1099 = vmax.f32 %v1034, 0.0
        %v1100 = vmax.f32 %v1037, 0.0
        %v1101 = vmax.f32 %v1040, 0.0
        %v1102 = vmax.f32 %v1043, 0.0
        %v1103 = vmax.f32 %v1046, 0.0
        %v1104 = vmax.f32 %v1049, 0.0
        %v1105 = vmax.f32 %v1052, 0.0
        %v1106 = vmax.f32 %v1055, 0.0
        %v1107 = vmax.f32 %v1058, 0.0
        %v1108 = vmax.f32 %v1061, 0.0
        %v1109 = vmax.f32 %v1064, 0.0
        %v1110 = vmax.f32 %v1067, 0.0
        %v1111 = vmax.f32 %v1070, 0.0
        %v1112 = vmax.f32 %v1073, 0.0
        %v1113 = vmax.f32 %v1076, 0.0
        %v1114 = vmax.f32 %v1079, 0.0
        %v1115 = vmax.f32 %v1082, 0.0
        %v1116 = vld [vmem:[%s7] sm:$0x1]
        %v1117 = vld [vmem:[#allocation2] sm:$0x1]
        %v1119 = vperm.slane %v1116, 0
        %v1121 = vmul.f32 %v1084, %v1119
        %v1122 = vmul.f32 %v1085, %v1119
        %v1123 = vmul.f32 %v1086, %v1119
        %v1124 = vmul.f32 %v1087, %v1119
        %v1125 = vmul.f32 %v1088, %v1119
        %v1126 = vmul.f32 %v1089, %v1119
        %v1127 = vmul.f32 %v1090, %v1119
        %v1128 = vmul.f32 %v1091, %v1119
        %v1129 = vmul.f32 %v1092, %v1119
        %v1130 = vmul.f32 %v1093, %v1119
        %v1131 = vmul.f32 %v1094, %v1119
        %v1132 = vmul.f32 %v1095, %v1119
        %v1133 = vmul.f32 %v1096, %v1119
        %v1134 = vmul.f32 %v1097, %v1119
        %v1135 = vmul.f32 %v1098, %v1119
        %v1136 = vmul.f32 %v1099, %v1119
        %v1137 = vmul.f32 %v1100, %v1119
        %v1138 = vmul.f32 %v1101, %v1119
        %v1139 = vmul.f32 %v1102, %v1119
        %v1140 = vmul.f32 %v1103, %v1119
        %v1141 = vmul.f32 %v1104, %v1119
        %v1142 = vmul.f32 %v1105, %v1119
        %v1143 = vmul.f32 %v1106, %v1119
        %v1144 = vmul.f32 %v1107, %v1119
        %v1145 = vmul.f32 %v1108, %v1119
        %v1146 = vmul.f32 %v1109, %v1119
        %v1147 = vmul.f32 %v1110, %v1119
        %v1148 = vmul.f32 %v1111, %v1119
        %v1149 = vmul.f32 %v1112, %v1119
        %v1150 = vmul.f32 %v1113, %v1119
        %v1151 = vmul.f32 %v1114, %v1119
        %v1152 = vmul.f32 %v1115, %v1119
        %v1153 = vsel %vm376, %v1121, 0.0
        %1154 = vadd.xlane.f32.xlu0 %v1153
        %v1155 = vpop.xlane.xlu0 %1154
        %v1156 = vsel %vm376, %v1122, 0.0
        %1157 = vadd.xlane.f32.xlu0 %v1156
        %v1158 = vpop.xlane.xlu0 %1157
        %v1159 = vsel %vm376, %v1123, 0.0
        %1160 = vadd.xlane.f32.xlu0 %v1159
        %v1161 = vpop.xlane.xlu0 %1160
        %v1162 = vsel %vm376, %v1124, 0.0
        %1163 = vadd.xlane.f32.xlu0 %v1162
        %v1164 = vpop.xlane.xlu0 %1163
        %v1165 = vsel %vm376, %v1125, 0.0
        %1166 = vadd.xlane.f32.xlu0 %v1165
        %v1167 = vpop.xlane.xlu0 %1166
        %v1168 = vsel %vm376, %v1126, 0.0
        %1169 = vadd.xlane.f32.xlu0 %v1168
        %v1170 = vpop.xlane.xlu0 %1169
        %v1171 = vsel %vm376, %v1127, 0.0
        %1172 = vadd.xlane.f32.xlu0 %v1171
        %v1173 = vpop.xlane.xlu0 %1172
        %v1174 = vsel %vm376, %v1128, 0.0
        %1175 = vadd.xlane.f32.xlu0 %v1174
        %v1176 = vpop.xlane.xlu0 %1175
        %v1177 = vsel %vm376, %v1129, 0.0
        %1178 = vadd.xlane.f32.xlu0 %v1177
        %v1179 = vpop.xlane.xlu0 %1178
        %v1180 = vsel %vm376, %v1130, 0.0
        %1181 = vadd.xlane.f32.xlu0 %v1180
        %v1182 = vpop.xlane.xlu0 %1181
        %v1183 = vsel %vm376, %v1131, 0.0
        %1184 = vadd.xlane.f32.xlu0 %v1183
        %v1185 = vpop.xlane.xlu0 %1184
        %v1186 = vsel %vm376, %v1132, 0.0
        %1187 = vadd.xlane.f32.xlu0 %v1186
        %v1188 = vpop.xlane.xlu0 %1187
        %v1189 = vsel %vm376, %v1133, 0.0
        %1190 = vadd.xlane.f32.xlu0 %v1189
        %v1191 = vpop.xlane.xlu0 %1190
        %v1192 = vsel %vm376, %v1134, 0.0
        %1193 = vadd.xlane.f32.xlu0 %v1192
        %v1194 = vpop.xlane.xlu0 %1193
        %v1195 = vsel %vm376, %v1135, 0.0
        %1196 = vadd.xlane.f32.xlu0 %v1195
        %v1197 = vpop.xlane.xlu0 %1196
        %v1198 = vsel %vm376, %v1136, 0.0
        %1199 = vadd.xlane.f32.xlu0 %v1198
        %v1200 = vpop.xlane.xlu0 %1199
        %v1201 = vsel %vm376, %v1137, 0.0
        %1202 = vadd.xlane.f32.xlu0 %v1201
        %v1203 = vpop.xlane.xlu0 %1202
        %v1204 = vsel %vm376, %v1138, 0.0
        %1205 = vadd.xlane.f32.xlu0 %v1204
        %v1206 = vpop.xlane.xlu0 %1205
        %v1207 = vsel %vm376, %v1139, 0.0
        %1208 = vadd.xlane.f32.xlu0 %v1207
        %v1209 = vpop.xlane.xlu0 %1208
        %v1210 = vsel %vm376, %v1140, 0.0
        %1211 = vadd.xlane.f32.xlu0 %v1210
        %v1212 = vpop.xlane.xlu0 %1211
        %v1213 = vsel %vm376, %v1141, 0.0
        %1214 = vadd.xlane.f32.xlu0 %v1213
        %v1215 = vpop.xlane.xlu0 %1214
        %v1216 = vsel %vm376, %v1142, 0.0
        %1217 = vadd.xlane.f32.xlu0 %v1216
        %v1218 = vpop.xlane.xlu0 %1217
        %v1219 = vsel %vm376, %v1143, 0.0
        %1220 = vadd.xlane.f32.xlu0 %v1219
        %v1221 = vpop.xlane.xlu0 %1220
        %v1222 = vsel %vm376, %v1144, 0.0
        %1223 = vadd.xlane.f32.xlu0 %v1222
        %v1224 = vpop.xlane.xlu0 %1223
        %v1225 = vsel %vm376, %v1145, 0.0
        %1226 = vadd.xlane.f32.xlu0 %v1225
        %v1227 = vpop.xlane.xlu0 %1226
        %v1228 = vsel %vm376, %v1146, 0.0
        %1229 = vadd.xlane.f32.xlu0 %v1228
        %v1230 = vpop.xlane.xlu0 %1229
        %v1231 = vsel %vm376, %v1147, 0.0
        %1232 = vadd.xlane.f32.xlu0 %v1231
        %v1233 = vpop.xlane.xlu0 %1232
        %v1234 = vsel %vm376, %v1148, 0.0
        %1235 = vadd.xlane.f32.xlu0 %v1234
        %v1236 = vpop.xlane.xlu0 %1235
        %v1237 = vsel %vm376, %v1149, 0.0
        %1238 = vadd.xlane.f32.xlu0 %v1237
        %v1239 = vpop.xlane.xlu0 %1238
        %v1240 = vsel %vm376, %v1150, 0.0
        %1241 = vadd.xlane.f32.xlu0 %v1240
        %v1242 = vpop.xlane.xlu0 %1241
        %v1243 = vsel %vm376, %v1151, 0.0
        %1244 = vadd.xlane.f32.xlu0 %v1243
        %v1245 = vpop.xlane.xlu0 %1244
        %v1246 = vsel %vm376, %v1152, 0.0
        %1247 = vadd.xlane.f32.xlu0 %v1246
        %v1248 = vpop.xlane.xlu0 %1247
        %v1250 = vperm.slane %v1117, 0
        %v1252 = vadd.f32 %v1155, %v1250
        %v1253 = vadd.f32 %v1158, %v1250
        %v1254 = vadd.f32 %v1161, %v1250
        %v1255 = vadd.f32 %v1164, %v1250
        %v1256 = vadd.f32 %v1167, %v1250
        %v1257 = vadd.f32 %v1170, %v1250
        %v1258 = vadd.f32 %v1173, %v1250
        %v1259 = vadd.f32 %v1176, %v1250
        %v1260 = vadd.f32 %v1179, %v1250
        %v1261 = vadd.f32 %v1182, %v1250
        %v1262 = vadd.f32 %v1185, %v1250
        %v1263 = vadd.f32 %v1188, %v1250
        %v1264 = vadd.f32 %v1191, %v1250
        %v1265 = vadd.f32 %v1194, %v1250
        %v1266 = vadd.f32 %v1197, %v1250
        %v1267 = vadd.f32 %v1200, %v1250
        %v1268 = vadd.f32 %v1203, %v1250
        %v1269 = vadd.f32 %v1206, %v1250
        %v1270 = vadd.f32 %v1209, %v1250
        %v1271 = vadd.f32 %v1212, %v1250
        %v1272 = vadd.f32 %v1215, %v1250
        %v1273 = vadd.f32 %v1218, %v1250
        %v1274 = vadd.f32 %v1221, %v1250
        %v1275 = vadd.f32 %v1224, %v1250
        %v1276 = vadd.f32 %v1227, %v1250
        %v1277 = vadd.f32 %v1230, %v1250
        %v1278 = vadd.f32 %v1233, %v1250
        %v1279 = vadd.f32 %v1236, %v1250
        %v1280 = vadd.f32 %v1239, %v1250
        %v1281 = vadd.f32 %v1242, %v1250
        %v1282 = vadd.f32 %v1245, %v1250
        %v1283 = vadd.f32 %v1248, %v1250
        %1285 = vset.pattern.permute.xlu0 0
        %1286 = vperm.xlu0 %1285, %v1252
        %v1287 = vpop.permute.xlu0 %1286
        %1290 = vset.pattern.permute.xlu0 0
        %1291 = vperm.xlu0 %1290, %v1253
        %v1292 = vpop.permute.xlu0 %1291
        %1295 = vset.pattern.permute.xlu0 0
        %1296 = vperm.xlu0 %1295, %v1254
        %v1297 = vpop.permute.xlu0 %1296
        %1300 = vset.pattern.permute.xlu0 0
        %1301 = vperm.xlu0 %1300, %v1255
        %v1302 = vpop.permute.xlu0 %1301
        %1305 = vset.pattern.permute.xlu0 0
        %1306 = vperm.xlu0 %1305, %v1256
        %v1307 = vpop.permute.xlu0 %1306
        %1310 = vset.pattern.permute.xlu0 0
        %1311 = vperm.xlu0 %1310, %v1257
        %v1312 = vpop.permute.xlu0 %1311
        %1315 = vset.pattern.permute.xlu0 0
        %1316 = vperm.xlu0 %1315, %v1258
        %v1317 = vpop.permute.xlu0 %1316
        %1320 = vset.pattern.permute.xlu0 0
        %1321 = vperm.xlu0 %1320, %v1259
        %v1322 = vpop.permute.xlu0 %1321
        %1325 = vset.pattern.permute.xlu0 0
        %1326 = vperm.xlu0 %1325, %v1260
        %v1327 = vpop.permute.xlu0 %1326
        %1330 = vset.pattern.permute.xlu0 0
        %1331 = vperm.xlu0 %1330, %v1261
        %v1332 = vpop.permute.xlu0 %1331
        %1335 = vset.pattern.permute.xlu0 0
        %1336 = vperm.xlu0 %1335, %v1262
        %v1337 = vpop.permute.xlu0 %1336
        %1340 = vset.pattern.permute.xlu0 0
        %1341 = vperm.xlu0 %1340, %v1263
        %v1342 = vpop.permute.xlu0 %1341
        %1345 = vset.pattern.permute.xlu0 0
        %1346 = vperm.xlu0 %1345, %v1264
        %v1347 = vpop.permute.xlu0 %1346
        %1350 = vset.pattern.permute.xlu0 0
        %1351 = vperm.xlu0 %1350, %v1265
        %v1352 = vpop.permute.xlu0 %1351
        %1355 = vset.pattern.permute.xlu0 0
        %1356 = vperm.xlu0 %1355, %v1266
        %v1357 = vpop.permute.xlu0 %1356
        %1360 = vset.pattern.permute.xlu0 0
        %1361 = vperm.xlu0 %1360, %v1267
        %v1362 = vpop.permute.xlu0 %1361
        %1365 = vset.pattern.permute.xlu0 0
        %1366 = vperm.xlu0 %1365, %v1268
        %v1367 = vpop.permute.xlu0 %1366
        %1370 = vset.pattern.permute.xlu0 0
        %1371 = vperm.xlu0 %1370, %v1269
        %v1372 = vpop.permute.xlu0 %1371
        %1375 = vset.pattern.permute.xlu0 0
        %1376 = vperm.xlu0 %1375, %v1270
        %v1377 = vpop.permute.xlu0 %1376
        %1380 = vset.pattern.permute.xlu0 0
        %1381 = vperm.xlu0 %1380, %v1271
        %v1382 = vpop.permute.xlu0 %1381
        %1385 = vset.pattern.permute.xlu0 0
        %1386 = vperm.xlu0 %1385, %v1272
        %v1387 = vpop.permute.xlu0 %1386
        %1390 = vset.pattern.permute.xlu0 0
        %1391 = vperm.xlu0 %1390, %v1273
        %v1392 = vpop.permute.xlu0 %1391
        %1395 = vset.pattern.permute.xlu0 0
        %1396 = vperm.xlu0 %1395, %v1274
        %v1397 = vpop.permute.xlu0 %1396
        %1400 = vset.pattern.permute.xlu0 0
        %1401 = vperm.xlu0 %1400, %v1275
        %v1402 = vpop.permute.xlu0 %1401
        %1405 = vset.pattern.permute.xlu0 0
        %1406 = vperm.xlu0 %1405, %v1276
        %v1407 = vpop.permute.xlu0 %1406
        %1410 = vset.pattern.permute.xlu0 0
        %1411 = vperm.xlu0 %1410, %v1277
        %v1412 = vpop.permute.xlu0 %1411
        %1415 = vset.pattern.permute.xlu0 0
        %1416 = vperm.xlu0 %1415, %v1278
        %v1417 = vpop.permute.xlu0 %1416
        %1420 = vset.pattern.permute.xlu0 0
        %1421 = vperm.xlu0 %1420, %v1279
        %v1422 = vpop.permute.xlu0 %1421
        %1425 = vset.pattern.permute.xlu0 0
        %1426 = vperm.xlu0 %1425, %v1280
        %v1427 = vpop.permute.xlu0 %1426
        %1430 = vset.pattern.permute.xlu0 0
        %1431 = vperm.xlu0 %1430, %v1281
        %v1432 = vpop.permute.xlu0 %1431
        %1435 = vset.pattern.permute.xlu0 0
        %1436 = vperm.xlu0 %1435, %v1282
        %v1437 = vpop.permute.xlu0 %1436
        %1440 = vset.pattern.permute.xlu0 0
        %1441 = vperm.xlu0 %1440, %v1283
        %v1442 = vpop.permute.xlu0 %1441
        %1444 = vst [vmem:[%s328] sm:$0xff] %v1287
        %1445 = vst [vmem:[%s328 + $0x8] sm:$0xff] %v1292
        %1446 = vst [vmem:[%s328 + $0x10] sm:$0xff] %v1297
        %1447 = vst [vmem:[%s328 + $0x18] sm:$0xff] %v1302
        %1448 = vst [vmem:[%s328 + $0x20] sm:$0xff] %v1307
        %1449 = vst [vmem:[%s328 + $0x28] sm:$0xff] %v1312
        %1450 = vst [vmem:[%s328 + $0x30] sm:$0xff] %v1317
        %1451 = vst [vmem:[%s328 + $0x38] sm:$0xff] %v1322
        %1452 = vst [vmem:[%s328 + $0x40] sm:$0xff] %v1327
        %1453 = vst [vmem:[%s328 + $0x48] sm:$0xff] %v1332
        %1454 = vst [vmem:[%s328 + $0x50] sm:$0xff] %v1337
        %1455 = vst [vmem:[%s328 + $0x58] sm:$0xff] %v1342
        %1456 = vst [vmem:[%s328 + $0x60] sm:$0xff] %v1347
        %1457 = vst [vmem:[%s328 + $0x68] sm:$0xff] %v1352
        %1458 = vst [vmem:[%s328 + $0x70] sm:$0xff] %v1357
        %1459 = vst [vmem:[%s328 + $0x78] sm:$0xff] %v1362
        %1460 = vst [vmem:[%s328 + $0x80] sm:$0xff] %v1367
        %1461 = vst [vmem:[%s328 + $0x88] sm:$0xff] %v1372
        %1462 = vst [vmem:[%s328 + $0x90] sm:$0xff] %v1377
        %1463 = vst [vmem:[%s328 + $0x98] sm:$0xff] %v1382
        %1464 = vst [vmem:[%s328 + $0xa0] sm:$0xff] %v1387
        %1465 = vst [vmem:[%s328 + $0xa8] sm:$0xff] %v1392
        %1466 = vst [vmem:[%s328 + $0xb0] sm:$0xff] %v1397
        %1467 = vst [vmem:[%s328 + $0xb8] sm:$0xff] %v1402
        %1468 = vst [vmem:[%s328 + $0xc0] sm:$0xff] %v1407
        %1469 = vst [vmem:[%s328 + $0xc8] sm:$0xff] %v1412
        %1470 = vst [vmem:[%s328 + $0xd0] sm:$0xff] %v1417
        %1471 = vst [vmem:[%s328 + $0xd8] sm:$0xff] %v1422
        %1472 = vst [vmem:[%s328 + $0xe0] sm:$0xff] %v1427
        %1473 = vst [vmem:[%s328 + $0xe8] sm:$0xff] %v1432
        %1474 = vst [vmem:[%s328 + $0xf0] sm:$0xff] %v1437
        %1475 = vst [vmem:[%s328 + $0xf8] sm:$0xff] %v1442
        %s1476 = sand.u32 %s227, 1
        %s1477 = scalar_lea.sflag [#allocation4], %s1476
        %s1478 = sand.u32 %s227, 1
        %s1479 = smul.addr %s1478, 256
        %s1480 = scalar_lea.vmem [#allocation3], %s1479
        // Predicated region
        $region57: #{tpu_custom_call.1} parent=55 // pred_check
          %p1481 = pneg %p237
        $region58: #{tpu_custom_call.1} parent=55 // pred_check_branch
          %1483 = sbr.rel (%p1481) target = $region60
        $region59: #{tpu_custom_call.1} parent=55 // pred_region
          %s1484 = smul.u32 32, %s25
          %1486 = vsyncadd %s1477, 0
          %s1487 = smul.addr %s1484, 8
          %s1488 = scalar_lea.hbm %s9, %s1487
          %s1489 = sshll.u32 %s1480, 4
          %s1490 = int_to_ptr.vmem [resolvable:$true] %s1489
          %s1491 = sshll.u32 %s1488, 4
          %s1492 = int_to_ptr.hbm [resolvable:$true] %s1491
          %1497 = dma.vmem_to_hbm [thread:$0]  %s1490, 4096, %s1492, %s1477, 128, 128, 8
        $region60: #{tpu_custom_call.1} parent=55 // pred_fallthru
          _
      $region56: #{tpu_custom_call.1} parent=5 // pred_fallthru
        _
      %p1498 = scmp.le.s32.totalorder 2, %s20
      // Predicated region
      $region61: #{tpu_custom_call.1} parent=5 // pred_check
        %p1499 = pneg %p1498
      $region62: #{tpu_custom_call.1} parent=5 // pred_check_branch
        %1501 = sbr.rel (%p1499) target = $region64
      $region63: #{tpu_custom_call.1} parent=5 // pred_region
        %s1502 = ssub.s32 %s20, 2
        // Predicated region
        $region65: #{tpu_custom_call.1} parent=63 // pred_check
          %p1503 = pneg %p243
        $region66: #{tpu_custom_call.1} parent=63 // pred_check_branch
          %1505 = sbr.rel (%p1503) target = $region68
        $region67: #{tpu_custom_call.1} parent=63 // pred_region
          %s1506 = sand.u32 %s228, 1
          %s1507 = scalar_lea.sflag [#allocation4], %s1506
          %s1508 = sand.u32 %s228, 1
          %s1509 = smul.addr %s1508, 256
          %s1510 = scalar_lea.vmem [#allocation3], %s1509
          %1512 = dma.done %s1507, 4096
        $region68: #{tpu_custom_call.1} parent=63 // pred_fallthru
          _
      $region64: #{tpu_custom_call.1} parent=5 // pred_fallthru
        _
    $region6: #{tpu_custom_call.1} parent=1 // loop_footer
      %s24 = sadd.s32 1, %s20
    $region7: #{tpu_custom_call.1} parent=1 // loop_footer_branch
      %19 = sbr.rel target = $region3
    $region8: #{tpu_custom_call.1} parent=1 // loop_exit
      _
    %1513 = vsyncpa [#allocation4], 1
    %s1514 = scalar_lea.sflag [#allocation4], 1
    %1515 = vsyncpa %s1514, 1

</llo_original>
